<compile_context>
chip_gen: v7x
topology: tpu7x:2x2x1
jax: 0.10.0
libtpu: 0.0.40
codegen_flags: <defaults>
</compile_context>

<pallas_src>
import functools

import jax
import jax.numpy as jnp
from jax import lax
from jax.experimental import pallas as pl
from jax.experimental.pallas import tpu as pltpu

block_length = 10   # matches PyTorch module's buffer size
n_emb = 100         # matches PyTorch module's n_emb
dropout_p = 0.2     # eval-mode dropout is identity (see TODO below)

_NEG_BIG = -1e30    # large finite negative; avoids exp(-inf - -inf) NaNs


def head_kernel(x_ref, wqkv_ref, o_ref, *, scale, h_pad):
    # x_ref:    (B, T, Cp)   bf16 activations, C zero-padded to Cp (lane-dense)
    # wqkv_ref: (Cp, 3*Hp)   bf16 fused [Wq | Wk | Wv], H zero-padded to Hp
    # o_ref:    (B, T, Hp)   f32 output; only first H columns are meaningful
    B, T, Cp = x_ref.shape
    Hp = h_pad

    # --- fused QKV projection: one MXU pass over all B*T rows ---------------
    x2d = x_ref[...].reshape(B * T, Cp)                        # layout-preserving
    qkv = jnp.dot(x2d, wqkv_ref[...],
                  preferred_element_type=jnp.float32)          # (B*T, 3*Hp) f32
    qkv = qkv.reshape(B, T, 3 * Hp)
    # 128-aligned lane slices -> no cross-tile copies.
    q = qkv[:, :, 0 * Hp:1 * Hp].astype(jnp.bfloat16)
    k = qkv[:, :, 1 * Hp:2 * Hp].astype(jnp.bfloat16)
    v = qkv[:, :, 2 * Hp:3 * Hp].astype(jnp.bfloat16)

    # --- scaled scores: contract head dims directly (no k transpose) --------
    wei = jnp.einsum('btd,bsd->bts', q, k,
                     preferred_element_type=jnp.float32)       # (B, T, T) f32

    # TODO(synk): training-mode dropout on `wei` via pltpu.prng_seed +
    # pltpu.prng_random_bits (eval mode => identity, matching PyTorch eval).

    # --- causal mask as an additive finite bias, fused with the scale -------
    row = lax.broadcasted_iota(jnp.int32, (T, T), 0)
    col = lax.broadcasted_iota(jnp.int32, (T, T), 1)
    bias = jnp.where(row >= col, 0.0, _NEG_BIG).astype(jnp.float32)
    wei = wei * scale + bias[None, :, :]

    # --- softmax in f32; reciprocal on the EUP instead of a VALU divide -----
    wei = wei - jnp.max(wei, axis=-1, keepdims=True)
    p = jnp.exp(wei)
    denom = jnp.sum(p, axis=-1, keepdims=True)
    p = p * pl.reciprocal(denom, approx=True)

    # --- weighted value sum --------------------------------------------------
    out = jnp.einsum('bts,bsd->btd', p.astype(jnp.bfloat16), v,
                     preferred_element_type=jnp.float32)       # (B, T, Hp)
    o_ref[...] = out.astype(o_ref.dtype)


@functools.partial(jax.jit, static_argnames=("num_heads",))
def head_forward(x, wq, wk, wv, num_heads):
    """x: (B, T, C) f32; wq/wk/wv: (C, H) f32 (pre-transposed vs PyTorch)."""
    B, T, C = x.shape
    H = wq.shape[1]
    Cp = 128 * pl.cdiv(C, 128)   # pad reduction dim to a full lane tile
    Hp = 128 * pl.cdiv(H, 128)   # pad head dim so all stores are lane-dense

    # Fused, zero-padded, bf16 QKV weight: (Cp, 3*Hp) = [Wq | Wk | Wv].
    def pad_w(w):
        return jnp.pad(w, ((0, Cp - C), (0, Hp - H)))

    w_qkv = jnp.concatenate([pad_w(wq), pad_w(wk), pad_w(wv)], axis=1)
    w_qkv = w_qkv.astype(jnp.bfloat16)
    x_p = jnp.pad(x, ((0, 0), (0, 0), (0, Cp - C))).astype(jnp.bfloat16)

    scale = float(num_heads) ** (-0.5)   # module scales by num_heads**-0.5
    kernel = functools.partial(head_kernel, scale=scale, h_pad=Hp)

    out_p = pl.pallas_call(
        kernel,
        out_shape=jax.ShapeDtypeStruct((B, T, Hp), jnp.float32),
        grid=(1,),   # single step: whole problem fits VMEM; no per-step overhead
        in_specs=[
            pl.BlockSpec((B, T, Cp), lambda i: (0, 0, 0)),
            pl.BlockSpec((Cp, 3 * Hp), lambda i: (0, 0)),
        ],
        out_specs=pl.BlockSpec((B, T, Hp), lambda i: (0, 0, 0)),
        compiler_params=pltpu.CompilerParams(
            dimension_semantics=("arbitrary",)),
    )(x_p, w_qkv)

    return out_p[:, :, :H]   # drop the zero-padded head columns


def reference_forward(x, wq, wk, wv, num_heads):
    """Pure-JAX reference mirroring the PyTorch forward (eval mode)."""
    T = x.shape[1]
    q = x @ wq
    k = x @ wk
    v = x @ wv
    wei = (q @ jnp.swapaxes(k, -2, -1)) * float(num_heads) ** (-0.5)
    mask = jnp.tril(jnp.ones((T, T), dtype=bool))
    wei = jnp.where(mask, wei, -jnp.inf)
    wei = jax.nn.softmax(wei, axis=-1)
    return wei @ v


if __name__ == "__main__":
    num_heads = 16   # in this module, num_heads doubles as the head size
    B, T, C = 2, 8, n_emb
    assert T <= block_length

    key = jax.random.PRNGKey(0)
    kx, kq, kk, kv = jax.random.split(key, 4)

    x = jax.random.normal(kx, (B, T, C), dtype=jnp.float32)
    # PyTorch nn.Linear(n_emb, num_heads, bias=False).weight is (num_heads,
    # n_emb); we store the transpose (n_emb, num_heads).
    wq = jax.random.normal(kq, (C, num_heads), jnp.float32) / jnp.sqrt(C)
    wk = jax.random.normal(kk, (C, num_heads), jnp.float32) / jnp.sqrt(C)
    wv = jax.random.normal(kv, (C, num_heads), jnp.float32) / jnp.sqrt(C)

    out = head_forward(x, wq, wk, wv, num_heads)
    out = jax.block_until_ready(out)
    assert out.shape == (B, T, num_heads)

    # The kernel feeds the MXU bf16 inputs (f32 accumulation), so compare
    # tightly against a reference with the same input precision, and loosely
    # against the pure-f32 reference.
    cast = lambda a: a.astype(jnp.bfloat16).astype(jnp.float32)
    ref_bf16_in = reference_forward(cast(x), cast(wq), cast(wk), cast(wv),
                                    num_heads)
    ref_f32 = reference_forward(x, wq, wk, wv, num_heads)

    assert jnp.allclose(out, ref_bf16_in, atol=2e-2, rtol=2e-2)
    assert jnp.allclose(out, ref_f32, atol=6e-2, rtol=6e-2)
    assert not jnp.any(jnp.isnan(out))

    print("KERNEL_OK")
</pallas_src>

<mosaic_0001>
module attributes {stable_mosaic.version = 11 : i64} {
  func.func @head_kernel(%arg0: i32, %arg1: memref<2x8x128xbf16, #tpu.memory_space<vmem>>, %arg2: memref<128x384xbf16, #tpu.memory_space<vmem>>, %arg3: memref<2x8x128xf32, #tpu.memory_space<vmem>>) attributes {dimension_semantics = [#tpu.dimension_semantics<arbitrary>], iteration_bounds = array<i64: 1>, scalar_prefetch = 0 : i64, scratch_operands = 0 : i64, tpu.core_type = #tpu.core_type<tc>, window_params = [{pipeline_mode = #tpu.pipeline_mode<synchronous>, transform_indices = @transform_0, window_bounds = array<i64: 2, 8, 128>}, {pipeline_mode = #tpu.pipeline_mode<synchronous>, transform_indices = @transform_1, window_bounds = array<i64: 128, 384>}, {pipeline_mode = #tpu.pipeline_mode<synchronous>, transform_indices = @transform_2, window_bounds = array<i64: 2, 8, 128>}]} {
    %c0 = arith.constant 0 : index
    %c0_0 = arith.constant 0 : index
    %c0_1 = arith.constant 0 : index
    %0 = vector.load %arg1[%c0, %c0_0, %c0_1] : memref<2x8x128xbf16, #tpu.memory_space<vmem>>, vector<2x8x128xbf16>
    %1 = vector.shape_cast %0 : vector<2x8x128xbf16> to vector<16x128xbf16>
    %c0_2 = arith.constant 0 : index
    %c0_3 = arith.constant 0 : index
    %2 = vector.load %arg2[%c0_2, %c0_3] : memref<128x384xbf16, #tpu.memory_space<vmem>>, vector<128x384xbf16>
    %cst = arith.constant dense<0.000000e+00> : vector<16x384xf32>
    %3 = tpu.matmul %1, %2, %cst {dimension_numbers = #tpu.dot_dimension_numbers<[1], [0], [0], [1], [0, 0, 1, 1], [], []>} : vector<16x128xbf16>, vector<128x384xbf16>, vector<16x384xf32> -> vector<16x384xf32>
    %4 = vector.shape_cast %3 : vector<16x384xf32> to vector<2x8x384xf32>
    %5 = vector.extract_strided_slice %4 {offsets = [0, 0, 0], sizes = [2, 8, 128], strides = [1, 1, 1]} : vector<2x8x384xf32> to vector<2x8x128xf32>
    %6 = arith.truncf %5 : vector<2x8x128xf32> to vector<2x8x128xbf16>
    %7 = vector.extract_strided_slice %4 {offsets = [0, 0, 128], sizes = [2, 8, 128], strides = [1, 1, 1]} : vector<2x8x384xf32> to vector<2x8x128xf32>
    %8 = arith.truncf %7 : vector<2x8x128xf32> to vector<2x8x128xbf16>
    %9 = vector.extract_strided_slice %4 {offsets = [0, 0, 256], sizes = [2, 8, 128], strides = [1, 1, 1]} : vector<2x8x384xf32> to vector<2x8x128xf32>
    %10 = arith.truncf %9 : vector<2x8x128xf32> to vector<2x8x128xbf16>
    "tpu.trace_start"() <{level = 10 : i32, message = "btd,bsd->bts"}> : () -> ()
    %cst_4 = arith.constant dense<0.000000e+00> : vector<2x8x8xf32>
    %11 = tpu.matmul %6, %8, %cst_4 {dimension_numbers = #tpu.dot_dimension_numbers<[2], [2], [1], [1], [0, 0, 0, 1, 1, 1], [0], [0]>} : vector<2x8x128xbf16>, vector<2x8x128xbf16>, vector<2x8x8xf32> -> vector<2x8x8xf32>
    "tpu.trace_stop"() : () -> ()
    %12 = tpu.iota {dimensions = array<i32: 0>} : vector<8x8xi32>
    %13 = tpu.iota {dimensions = array<i32: 1>} : vector<8x8xi32>
    %14 = arith.cmpi sge, %12, %13 : vector<8x8xi32>
    %cst_5 = arith.constant 0.000000e+00 : f32
    %cst_6 = arith.constant -1.000000e+30 : f32
    %15 = vector.broadcast %cst_5 : f32 to vector<8x8xf32>
    %16 = vector.broadcast %cst_6 : f32 to vector<8x8xf32>
    %17 = arith.select %14, %15, %16 : vector<8x8xi1>, vector<8x8xf32>
    %cst_7 = arith.constant 2.500000e-01 : f32
    %18 = vector.broadcast %cst_7 : f32 to vector<2x8x8xf32>
    %19 = arith.mulf %11, %18 : vector<2x8x8xf32>
    %20 = vector.shape_cast %17 : vector<8x8xf32> to vector<1x8x8xf32>
    %21 = vector.broadcast %20 : vector<1x8x8xf32> to vector<2x8x8xf32>
    %22 = arith.addf %19, %21 : vector<2x8x8xf32>
    %cst_8 = arith.constant dense<0xFF800000> : vector<2x8xf32>
    %23 = vector.multi_reduction <maximumf>, %22, %cst_8 [2] : vector<2x8x8xf32> to vector<2x8xf32>
    %24 = vector.shape_cast %23 : vector<2x8xf32> to vector<2x8x1xf32>
    %25 = vector.broadcast %24 : vector<2x8x1xf32> to vector<2x8x8xf32>
    %26 = arith.subf %22, %25 : vector<2x8x8xf32>
    %27 = math.exp %26 : vector<2x8x8xf32>
    %cst_9 = arith.constant dense<0.000000e+00> : vector<2x8xf32>
    %28 = vector.multi_reduction <add>, %27, %cst_9 [2] : vector<2x8x8xf32> to vector<2x8xf32>
    %29 = vector.shape_cast %28 : vector<2x8xf32> to vector<2x8x1xf32>
    %30 = tpu.reciprocal %29 {approx = true} : vector<2x8x1xf32> -> vector<2x8x1xf32>
    %31 = vector.broadcast %30 : vector<2x8x1xf32> to vector<2x8x8xf32>
    %32 = arith.mulf %27, %31 : vector<2x8x8xf32>
    %33 = arith.truncf %32 : vector<2x8x8xf32> to vector<2x8x8xbf16>
    "tpu.trace_start"() <{level = 10 : i32, message = "bts,bsd->btd"}> : () -> ()
    %cst_10 = arith.constant dense<0.000000e+00> : vector<2x8x128xf32>
    %34 = tpu.matmul %33, %10, %cst_10 {dimension_numbers = #tpu.dot_dimension_numbers<[2], [1], [1], [2], [0, 0, 0, 1, 1, 2], [0], [0]>} : vector<2x8x8xbf16>, vector<2x8x128xbf16>, vector<2x8x128xf32> -> vector<2x8x128xf32>
    "tpu.trace_stop"() : () -> ()
    %c0_11 = arith.constant 0 : index
    %c0_12 = arith.constant 0 : index
    %c0_13 = arith.constant 0 : index
    %35 = vector.load %arg3[%c0_11, %c0_12, %c0_13] : memref<2x8x128xf32, #tpu.memory_space<vmem>>, vector<2x8x128xf32>
    tpu.vector_store %arg3[%c0_11, %c0_12, %c0_13], %34 {strides = array<i32>} : memref<2x8x128xf32, #tpu.memory_space<vmem>>, vector<2x8x128xf32>,
    return
  }
  func.func @transform_0(%arg0: i32) -> (i32, i32, i32) {
    %c0_i32 = arith.constant 0 : i32
    %c0_i32_0 = arith.constant 0 : i32
    %c0_i32_1 = arith.constant 0 : i32
    %c0_i32_2 = arith.constant 0 : i32
    return %c0_i32, %c0_i32_0, %c0_i32_1 : i32, i32, i32
  }
  func.func @transform_1(%arg0: i32) -> (i32, i32) {
    %c0_i32 = arith.constant 0 : i32
    %c0_i32_0 = arith.constant 0 : i32
    %c0_i32_1 = arith.constant 0 : i32
    return %c0_i32, %c0_i32_0 : i32, i32
  }
  func.func @transform_2(%arg0: i32) -> (i32, i32, i32) {
    %c0_i32 = arith.constant 0 : i32
    %c0_i32_0 = arith.constant 0 : i32
    %c0_i32_1 = arith.constant 0 : i32
    %c0_i32_2 = arith.constant 0 : i32
    return %c0_i32, %c0_i32_0, %c0_i32_1 : i32, i32, i32
  }
}

</mosaic_0001>

<llo_original>
// kernel: head_forward.1
$region0: #{head_forward.1}
  #allocation0 [shape = 'u32[]', space=smem, size = 0x4, offset = 0x4, fixed_abs, tag = 'smem constant byte address 0x4 - core index']
  #allocation1 [shape = 'u32[144,128]{1,0:T(1,128)}', space=vmem, size = 0x12000, scoped, tag = 'internal scratch']
  %s0 = inlined_call_operand.vmem [shape: bf16[2,8,128], index: 0, kind: input, shape index: {}]
  %s1 = inlined_call_operand.vmem [shape: bf16[128,384], index: 1, kind: input, shape index: {}]
  %s2 = inlined_call_operand.hbm [shape: f32[2,8,128], index: 2, kind: output, shape index: {}]
  %s3 = sld [smem:[#allocation0]]
  $region18: #{head_forward.1} parent=0
    _
  %s5 = ssub.s32 1, %s3
  %s6 = scalar_select 0, %s5, %s3
  $region1: #{head_forward.1} parent=0
    #allocation2 [shape = 'u8[8192]{0}', space=vmem, size = 0x2000, scoped, tag = 'output window, operand 0, single buffered']
    #allocation3 [shape = 's32[1]{0}', space=sflag, size = 0x4, scoped, tag = 'scoped memory for head_forward.1']
    %7 = vsyncpa [#allocation3], 0
    // Predicated region
    $region2: #{head_forward.1} parent=1 // pred_check
      _
    $region3: #{head_forward.1} parent=1 // pred_check_branch
      %9 = sbr.rel (0) target = $region5
    $region4: #{head_forward.1} parent=1 // pred_region
      _
    $region5: #{head_forward.1} parent=1 // pred_fallthru
      _
    // Predicated region
    $region6: #{head_forward.1} parent=1 // pred_check
      _
    $region7: #{head_forward.1} parent=1 // pred_check_branch
      %11 = sbr.rel (0) target = $region9
    $region8: #{head_forward.1} parent=1 // pred_region
      _
    $region9: #{head_forward.1} parent=1 // pred_fallthru
      _
    %v13 = vld [vmem:[%s0] sm:$0xf]
    %v14 = vld [vmem:[%s0 + $0x4] sm:$0xf]
    %v15 = vld [vmem:[%s1] sm:$0xff]
    %v16 = vld [vmem:[%s1 + $0x8] sm:$0xf]
    %v17 = vld [vmem:[%s1 + $0xc] sm:$0xff]
    %v18 = vld [vmem:[%s1 + $0x14] sm:$0xf]
    %v19 = vld [vmem:[%s1 + $0x18] sm:$0xff]
    %v20 = vld [vmem:[%s1 + $0x20] sm:$0xf]
    %v21 = vld [vmem:[%s1 + $0x24] sm:$0xff]
    %v22 = vld [vmem:[%s1 + $0x2c] sm:$0xf]
    %v23 = vld [vmem:[%s1 + $0x30] sm:$0xff]
    %v24 = vld [vmem:[%s1 + $0x38] sm:$0xf]
    %v25 = vld [vmem:[%s1 + $0x3c] sm:$0xff]
    %v26 = vld [vmem:[%s1 + $0x44] sm:$0xf]
    %v27 = vld [vmem:[%s1 + $0x48] sm:$0xff]
    %v28 = vld [vmem:[%s1 + $0x50] sm:$0xf]
    %v29 = vld [vmem:[%s1 + $0x54] sm:$0xff]
    %v30 = vld [vmem:[%s1 + $0x5c] sm:$0xf]
    %v31 = vld [vmem:[%s1 + $0x60] sm:$0xff]
    %v32 = vld [vmem:[%s1 + $0x68] sm:$0xf]
    %v33 = vld [vmem:[%s1 + $0x6c] sm:$0xff]
    %v34 = vld [vmem:[%s1 + $0x74] sm:$0xf]
    %v35 = vld [vmem:[%s1 + $0x78] sm:$0xff]
    %v36 = vld [vmem:[%s1 + $0x80] sm:$0xf]
    %v37 = vld [vmem:[%s1 + $0x84] sm:$0xff]
    %v38 = vld [vmem:[%s1 + $0x8c] sm:$0xf]
    %v39 = vld [vmem:[%s1 + $0x90] sm:$0xff]
    %v40 = vld [vmem:[%s1 + $0x98] sm:$0xf]
    %v41 = vld [vmem:[%s1 + $0x9c] sm:$0xff]
    %v42 = vld [vmem:[%s1 + $0xa4] sm:$0xf]
    %v43 = vld [vmem:[%s1 + $0xa8] sm:$0xff]
    %v44 = vld [vmem:[%s1 + $0xb0] sm:$0xf]
    %v45 = vld [vmem:[%s1 + $0xb4] sm:$0xff]
    %v46 = vld [vmem:[%s1 + $0xbc] sm:$0xf]
    %v49 = vunpack.c.l.b16 %v13
    %v50 = vunpack.c.l.b16 %v14
    %v51 = vpack.c.b16 %v50, %v49
    %v85 = vunpack.c.l.b16 %v15
    %v86 = vunpack.c.h.b16 %v15
    %v87 = vunpack.c.l.b16 %v16
    %v88 = vunpack.c.l.b16 %v17
    %v89 = vunpack.c.h.b16 %v17
    %v90 = vunpack.c.l.b16 %v18
    %v91 = vunpack.c.l.b16 %v19
    %v92 = vunpack.c.h.b16 %v19
    %v93 = vunpack.c.l.b16 %v20
    %v94 = vunpack.c.l.b16 %v21
    %v95 = vunpack.c.h.b16 %v21
    %v96 = vunpack.c.l.b16 %v22
    %v97 = vunpack.c.l.b16 %v23
    %v98 = vunpack.c.h.b16 %v23
    %v99 = vunpack.c.l.b16 %v24
    %v100 = vunpack.c.l.b16 %v25
    %v101 = vunpack.c.h.b16 %v25
    %v102 = vunpack.c.l.b16 %v26
    %v103 = vunpack.c.l.b16 %v27
    %v104 = vunpack.c.h.b16 %v27
    %v105 = vunpack.c.l.b16 %v28
    %v106 = vunpack.c.l.b16 %v29
    %v107 = vunpack.c.h.b16 %v29
    %v108 = vunpack.c.l.b16 %v30
    %v109 = vunpack.c.l.b16 %v31
    %v110 = vunpack.c.h.b16 %v31
    %v111 = vunpack.c.l.b16 %v32
    %v112 = vunpack.c.l.b16 %v33
    %v113 = vunpack.c.h.b16 %v33
    %v114 = vunpack.c.l.b16 %v34
    %v115 = vunpack.c.l.b16 %v35
    %v116 = vunpack.c.h.b16 %v35
    %v117 = vunpack.c.l.b16 %v36
    %v118 = vunpack.c.l.b16 %v37
    %v119 = vunpack.c.h.b16 %v37
    %v120 = vunpack.c.l.b16 %v38
    %v121 = vunpack.c.l.b16 %v39
    %v122 = vunpack.c.h.b16 %v39
    %v123 = vunpack.c.l.b16 %v40
    %v124 = vunpack.c.l.b16 %v41
    %v125 = vunpack.c.h.b16 %v41
    %v126 = vunpack.c.l.b16 %v42
    %v127 = vunpack.c.l.b16 %v43
    %v128 = vunpack.c.h.b16 %v43
    %v129 = vunpack.c.l.b16 %v44
    %v130 = vunpack.c.l.b16 %v45
    %v131 = vunpack.c.h.b16 %v45
    %v132 = vunpack.c.l.b16 %v46
    %v133 = vpack.c.b16 %v88, %v85
    %v134 = vpack.c.b16 %v89, %v86
    %v135 = vpack.c.b16 %v90, %v87
    %v136 = vpack.c.b16 %v94, %v91
    %v137 = vpack.c.b16 %v95, %v92
    %v138 = vpack.c.b16 %v96, %v93
    %v139 = vpack.c.b16 %v100, %v97
    %v140 = vpack.c.b16 %v101, %v98
    %v141 = vpack.c.b16 %v102, %v99
    %v142 = vpack.c.b16 %v106, %v103
    %v143 = vpack.c.b16 %v107, %v104
    %v144 = vpack.c.b16 %v108, %v105
    %v145 = vpack.c.b16 %v112, %v109
    %v146 = vpack.c.b16 %v113, %v110
    %v147 = vpack.c.b16 %v114, %v111
    %v148 = vpack.c.b16 %v118, %v115
    %v149 = vpack.c.b16 %v119, %v116
    %v150 = vpack.c.b16 %v120, %v117
    %v151 = vpack.c.b16 %v124, %v121
    %v152 = vpack.c.b16 %v125, %v122
    %v153 = vpack.c.b16 %v126, %v123
    %v154 = vpack.c.b16 %v130, %v127
    %v155 = vpack.c.b16 %v131, %v128
    %v156 = vpack.c.b16 %v132, %v129
    %181 = vmatprep.subr.bf16.mxu0 %v134
    %182 = vmatpush1.bf16.msra.mxu0 %v133
    %183 = vmatprep.subr.bf16.mxu0 %v137
    %184 = vmatpush1.bf16.msra.mxu0 %v136
    %185 = vmatprep.subr.bf16.mxu0 %v140
    %186 = vmatpush1.bf16.msra.mxu0 %v139
    %187 = vmatprep.subr.bf16.mxu0 %v143
    %188 = vmatpush1.bf16.msra.mxu0 %v142
    %189 = vmatprep.subr.bf16.mxu0 %v146
    %190 = vmatpush1.bf16.msra.mxu0 %v145
    %191 = vmatprep.subr.bf16.mxu0 %v149
    %192 = vmatpush1.bf16.msra.mxu0 %v148
    %193 = vmatprep.subr.bf16.mxu0 %v152
    %194 = vmatpush1.bf16.msra.mxu0 %v151
    %195 = vmatprep.subr.bf16.mxu0 %v155
    %196 = vmatpush1.bf16.msra.mxu0 %v154
    %197 = vmatprep.subr.bf16.mxu0 0
    %198 = vmatpush1.bf16.msra.mxu0 0
    %199 = vmatprep.subr.bf16.mxu0 0
    %200 = vmatpush1.bf16.msra.mxu0 0
    %201 = vmatprep.subr.bf16.mxu0 0
    %202 = vmatpush1.bf16.msra.mxu0 0
    %203 = vmatprep.subr.bf16.mxu0 0
    %204 = vmatpush1.bf16.msra.mxu0 0
    %205 = vmatprep.subr.bf16.mxu0 0
    %206 = vmatpush1.bf16.msra.mxu0 0
    %207 = vmatprep.subr.bf16.mxu0 0
    %208 = vmatpush1.bf16.msra.mxu0 0
    %209 = vmatprep.subr.bf16.mxu0 0
    %210 = vmatpush1.bf16.msra.mxu0 0
    %211 = vmatprep.subr.bf16.mxu0 0
    %212 = vmatpush1.bf16.msra.mxu0 0
    %213 = vmatprep.mubr.bf16.mxu0 0
    %214 = vmatmul.mubr.bf16.gmra.mrb[0].mxu0 %v51
    %v215 = vpop.f32.mrb[0].mxu0
    %v216 = vadd.f32 0.0, %v215
    %v217 = vpop.f32.mrb[0].mxu0
    %v218 = vadd.f32 0.0, %v217
    %v219 = vpop.f32.mrb[0].mxu0
    %v220 = vadd.f32 0.0, %v219
    %v221 = vpop.f32.mrb[0].mxu0
    %v222 = vadd.f32 0.0, %v221
    %223 = vdwg.mxu0
    %224 = vmatprep.subr.bf16.mxu0 0
    %225 = vmatpush1.bf16.msra.mxu0 %v135
    %226 = vmatprep.subr.bf16.mxu0 0
    %227 = vmatpush1.bf16.msra.mxu0 %v138
    %228 = vmatprep.subr.bf16.mxu0 0
    %229 = vmatpush1.bf16.msra.mxu0 %v141
    %230 = vmatprep.subr.bf16.mxu0 0
    %231 = vmatpush1.bf16.msra.mxu0 %v144
    %232 = vmatprep.subr.bf16.mxu0 0
    %233 = vmatpush1.bf16.msra.mxu0 %v147
    %234 = vmatprep.subr.bf16.mxu0 0
    %235 = vmatpush1.bf16.msra.mxu0 %v150
    %236 = vmatprep.subr.bf16.mxu0 0
    %237 = vmatpush1.bf16.msra.mxu0 %v153
    %238 = vmatprep.subr.bf16.mxu0 0
    %239 = vmatpush1.bf16.msra.mxu0 %v156
    %240 = vmatprep.subr.bf16.mxu0 0
    %241 = vmatpush1.bf16.msra.mxu0 0
    %242 = vmatprep.subr.bf16.mxu0 0
    %243 = vmatpush1.bf16.msra.mxu0 0
    %244 = vmatprep.subr.bf16.mxu0 0
    %245 = vmatpush1.bf16.msra.mxu0 0
    %246 = vmatprep.subr.bf16.mxu0 0
    %247 = vmatpush1.bf16.msra.mxu0 0
    %248 = vmatprep.subr.bf16.mxu0 0
    %249 = vmatpush1.bf16.msra.mxu0 0
    %250 = vmatprep.subr.bf16.mxu0 0
    %251 = vmatpush1.bf16.msra.mxu0 0
    %252 = vmatprep.subr.bf16.mxu0 0
    %253 = vmatpush1.bf16.msra.mxu0 0
    %254 = vmatprep.subr.bf16.mxu0 0
    %255 = vmatpush1.bf16.msra.mxu0 0
    %256 = vmatprep.mubr.bf16.mxu0 0
    %257 = vmatmul.mubr.bf16.gmra.mrb[0].mxu0 %v51
    %v258 = vpop.f32.mrb[0].mxu0
    %v259 = vadd.f32 0.0, %v258
    %v260 = vpop.f32.mrb[0].mxu0
    %v261 = vpop.f32.mrb[0].mxu0
    %v262 = vadd.f32 0.0, %v261
    %v263 = vpop.f32.mrb[0].mxu0
    %264 = vdwg.mxu0
    %v265 = vpack.c.bf16 %v216, %v216
    %v266 = vpack.c.bf16 %v220, %v220
    %v267 = vpack.c.bf16 %v218, %v218
    %v268 = vpack.c.bf16 %v222, %v222
    %v269 = vpack.c.bf16 %v259, %v259
    %v270 = vpack.c.bf16 %v262, %v262
    %271 = vmatprep.subr.bf16.mxu0 0
    %272 = vmatpush1.bf16.xpose.msra.mxu0 %v267
    %273 = vmatprep.subr.bf16.mxu0 0
    %274 = vmatpush1.bf16.xpose.msra.mxu0 0
    %275 = vmatprep.subr.bf16.mxu0 0
    %276 = vmatpush1.bf16.xpose.msra.mxu0 0
    %277 = vmatprep.subr.bf16.mxu0 0
    %278 = vmatpush1.bf16.xpose.msra.mxu0 0
    %279 = vmatprep.subr.bf16.mxu0 0
    %280 = vmatpush1.bf16.xpose.msra.mxu0 0
    %281 = vmatprep.subr.bf16.mxu0 0
    %282 = vmatpush1.bf16.xpose.msra.mxu0 0
    %283 = vmatprep.subr.bf16.mxu0 0
    %284 = vmatpush1.bf16.xpose.msra.mxu0 0
    %285 = vmatprep.subr.bf16.mxu0 0
    %286 = vmatpush1.bf16.xpose.msra.mxu0 0
    %287 = vmatprep.subr.bf16.mxu0 0
    %288 = vmatpush1.bf16.xpose.msra.mxu0 0
    %289 = vmatprep.subr.bf16.mxu0 0
    %290 = vmatpush1.bf16.xpose.msra.mxu0 0
    %291 = vmatprep.subr.bf16.mxu0 0
    %292 = vmatpush1.bf16.xpose.msra.mxu0 0
    %293 = vmatprep.subr.bf16.mxu0 0
    %294 = vmatpush1.bf16.xpose.msra.mxu0 0
    %295 = vmatprep.subr.bf16.mxu0 0
    %296 = vmatpush1.bf16.xpose.msra.mxu0 0
    %297 = vmatprep.subr.bf16.mxu0 0
    %298 = vmatpush1.bf16.xpose.msra.mxu0 0
    %299 = vmatprep.subr.bf16.mxu0 0
    %300 = vmatpush1.bf16.xpose.msra.mxu0 0
    %301 = vmatprep.subr.bf16.mxu0 0
    %302 = vmatpush1.bf16.xpose.msra.mxu0 0
    %303 = vmatprep.mubr.bf16.mxu0 0
    %304 = vmatmul.mubr.bf16.gmra.mrb[0].mxu0 %v265
    %v305 = vpop.f32.mrb[0].mxu0
    %v306 = vadd.f32 0.0, %v305
    %v307 = vpop.f32.mrb[0].mxu0
    %v308 = vpop.f32.mrb[0].mxu0
    %v309 = vpop.f32.mrb[0].mxu0
    %310 = vdwg.mxu0
    %311 = vmatprep.subr.bf16.mxu0 0
    %312 = vmatpush1.bf16.xpose.msra.mxu0 %v268
    %313 = vmatprep.subr.bf16.mxu0 0
    %314 = vmatpush1.bf16.xpose.msra.mxu0 0
    %315 = vmatprep.subr.bf16.mxu0 0
    %316 = vmatpush1.bf16.xpose.msra.mxu0 0
    %317 = vmatprep.subr.bf16.mxu0 0
    %318 = vmatpush1.bf16.xpose.msra.mxu0 0
    %319 = vmatprep.subr.bf16.mxu0 0
    %320 = vmatpush1.bf16.xpose.msra.mxu0 0
    %321 = vmatprep.subr.bf16.mxu0 0
    %322 = vmatpush1.bf16.xpose.msra.mxu0 0
    %323 = vmatprep.subr.bf16.mxu0 0
    %324 = vmatpush1.bf16.xpose.msra.mxu0 0
    %325 = vmatprep.subr.bf16.mxu0 0
    %326 = vmatpush1.bf16.xpose.msra.mxu0 0
    %327 = vmatprep.subr.bf16.mxu0 0
    %328 = vmatpush1.bf16.xpose.msra.mxu0 0
    %329 = vmatprep.subr.bf16.mxu0 0
    %330 = vmatpush1.bf16.xpose.msra.mxu0 0
    %331 = vmatprep.subr.bf16.mxu0 0
    %332 = vmatpush1.bf16.xpose.msra.mxu0 0
    %333 = vmatprep.subr.bf16.mxu0 0
    %334 = vmatpush1.bf16.xpose.msra.mxu0 0
    %335 = vmatprep.subr.bf16.mxu0 0
    %336 = vmatpush1.bf16.xpose.msra.mxu0 0
    %337 = vmatprep.subr.bf16.mxu0 0
    %338 = vmatpush1.bf16.xpose.msra.mxu0 0
    %339 = vmatprep.subr.bf16.mxu0 0
    %340 = vmatpush1.bf16.xpose.msra.mxu0 0
    %341 = vmatprep.subr.bf16.mxu0 0
    %342 = vmatpush1.bf16.xpose.msra.mxu0 0
    %343 = vmatprep.mubr.bf16.mxu0 0
    %344 = vmatmul.mubr.bf16.gmra.mrb[0].mxu0 %v266
    %v345 = vpop.f32.mrb[0].mxu0
    %v346 = vadd.f32 0.0, %v345
    %v347 = vpop.f32.mrb[0].mxu0
    %v348 = vpop.f32.mrb[0].mxu0
    %v349 = vpop.f32.mrb[0].mxu0
    %350 = vdwg.mxu0
    %v351 = vlaneseq
    %v352 = vshrl.u32 %v351, 7
    %v353 = vlaneseq
    %v354 = vand.u32 %v353, 127
    %vm355 = vcmp.ge.s32.totalorder %v352, %v354
    %v356 = vsel %vm355, 0.0, -1e+30
    %v357 = vmul.f32 %v306, 0.25
    %v358 = vmul.f32 %v346, 0.25
    %v359 = vadd.f32 %v357, %v356
    %v360 = vadd.f32 %v358, %v356
    %vm361 = vcmask 64512
    %v362 = vsel %vm361, %v359, -inf
    %363 = vmax.xlane.f32.xlu0 %v362
    %v364 = vpop.xlane.xlu0 %363
    %v365 = vsel %vm361, %v360, -inf
    %366 = vmax.xlane.f32.xlu0 %v365
    %v367 = vpop.xlane.xlu0 %366
    %v368 = vsub.f32 %v359, %v364
    %v369 = vsub.f32 %v360, %v367
    %v370 = vmul.f32 %v368, 1.442695
    %v371 = vpow.pop %v370
    %v372 = vmul.f32 %v369, 1.442695
    %v373 = vpow.pop %v372
    %v374 = vsel %vm361, %v371, 0.0
    %375 = vadd.xlane.f32.xlu0 %v374
    %v376 = vpop.xlane.xlu0 %375
    %v377 = vsel %vm361, %v373, 0.0
    %378 = vadd.xlane.f32.xlu0 %v377
    %v379 = vpop.xlane.xlu0 %378
    %v380 = vrcp.pop %v376
    %v381 = vrcp.pop %v379
    %v382 = vmul.f32 %v371, %v380
    %v383 = vmul.f32 %v373, %v381
    %v384 = vpack.c.bf16 %v382, %v382
    %v385 = vpack.c.bf16 %v383, %v383
    %v387 = vsel %vm361, %v384, 0
    %vm389 = vcmask 1043456
    %v391 = vsel %vm389, %v269, 0
    %393 = vmatprep.subr.bf16.mxu0 0
    %394 = vmatpush1.bf16.msra.mxu0 %v391
    %395 = vmatprep.subr.bf16.mxu0 0
    %396 = vmatpush1.bf16.msra.mxu0 0
    %397 = vmatprep.subr.bf16.mxu0 0
    %398 = vmatpush1.bf16.msra.mxu0 0
    %399 = vmatprep.subr.bf16.mxu0 0
    %400 = vmatpush1.bf16.msra.mxu0 0
    %401 = vmatprep.subr.bf16.mxu0 0
    %402 = vmatpush1.bf16.msra.mxu0 0
    %403 = vmatprep.subr.bf16.mxu0 0
    %404 = vmatpush1.bf16.msra.mxu0 0
    %405 = vmatprep.subr.bf16.mxu0 0
    %406 = vmatpush1.bf16.msra.mxu0 0
    %407 = vmatprep.subr.bf16.mxu0 0
    %408 = vmatpush1.bf16.msra.mxu0 0
    %409 = vmatprep.subr.bf16.mxu0 0
    %410 = vmatpush1.bf16.msra.mxu0 0
    %411 = vmatprep.subr.bf16.mxu0 0
    %412 = vmatpush1.bf16.msra.mxu0 0
    %413 = vmatprep.subr.bf16.mxu0 0
    %414 = vmatpush1.bf16.msra.mxu0 0
    %415 = vmatprep.subr.bf16.mxu0 0
    %416 = vmatpush1.bf16.msra.mxu0 0
    %417 = vmatprep.subr.bf16.mxu0 0
    %418 = vmatpush1.bf16.msra.mxu0 0
    %419 = vmatprep.subr.bf16.mxu0 0
    %420 = vmatpush1.bf16.msra.mxu0 0
    %421 = vmatprep.subr.bf16.mxu0 0
    %422 = vmatpush1.bf16.msra.mxu0 0
    %423 = vmatprep.subr.bf16.mxu0 0
    %424 = vmatpush1.bf16.msra.mxu0 0
    %425 = vmatprep.mubr.bf16.mxu0 0
    %426 = vmatmul.mubr.bf16.gmra.mrb[0].mxu0 %v387
    %v427 = vpop.f32.mrb[0].mxu0
    %v428 = vadd.f32 0.0, %v427
    %v429 = vpop.f32.mrb[0].mxu0
    %v430 = vpop.f32.mrb[0].mxu0
    %v431 = vpop.f32.mrb[0].mxu0
    %432 = vdwg.mxu0
    %v434 = vsel %vm361, %v385, 0
    %v437 = vsel %vm389, %v270, 0
    %439 = vmatprep.subr.bf16.mxu0 0
    %440 = vmatpush1.bf16.msra.mxu0 %v437
    %441 = vmatprep.subr.bf16.mxu0 0
    %442 = vmatpush1.bf16.msra.mxu0 0
    %443 = vmatprep.subr.bf16.mxu0 0
    %444 = vmatpush1.bf16.msra.mxu0 0
    %445 = vmatprep.subr.bf16.mxu0 0
    %446 = vmatpush1.bf16.msra.mxu0 0
    %447 = vmatprep.subr.bf16.mxu0 0
    %448 = vmatpush1.bf16.msra.mxu0 0
    %449 = vmatprep.subr.bf16.mxu0 0
    %450 = vmatpush1.bf16.msra.mxu0 0
    %451 = vmatprep.subr.bf16.mxu0 0
    %452 = vmatpush1.bf16.msra.mxu0 0
    %453 = vmatprep.subr.bf16.mxu0 0
    %454 = vmatpush1.bf16.msra.mxu0 0
    %455 = vmatprep.subr.bf16.mxu0 0
    %456 = vmatpush1.bf16.msra.mxu0 0
    %457 = vmatprep.subr.bf16.mxu0 0
    %458 = vmatpush1.bf16.msra.mxu0 0
    %459 = vmatprep.subr.bf16.mxu0 0
    %460 = vmatpush1.bf16.msra.mxu0 0
    %461 = vmatprep.subr.bf16.mxu0 0
    %462 = vmatpush1.bf16.msra.mxu0 0
    %463 = vmatprep.subr.bf16.mxu0 0
    %464 = vmatpush1.bf16.msra.mxu0 0
    %465 = vmatprep.subr.bf16.mxu0 0
    %466 = vmatpush1.bf16.msra.mxu0 0
    %467 = vmatprep.subr.bf16.mxu0 0
    %468 = vmatpush1.bf16.msra.mxu0 0
    %469 = vmatprep.subr.bf16.mxu0 0
    %470 = vmatpush1.bf16.msra.mxu0 0
    %471 = vmatprep.mubr.bf16.mxu0 0
    %472 = vmatmul.mubr.bf16.gmra.mrb[0].mxu0 %v434
    %v473 = vpop.f32.mrb[0].mxu0
    %v474 = vadd.f32 0.0, %v473
    %v475 = vpop.f32.mrb[0].mxu0
    %v476 = vpop.f32.mrb[0].mxu0
    %v477 = vpop.f32.mrb[0].mxu0
    %478 = vdwg.mxu0
    %479 = vst [vmem:[#allocation2] sm:$0xff] %v428
    %480 = vst [vmem:[#allocation2 + $0x8] sm:$0xff] %v474
    // Predicated region
    $region10: #{head_forward.1} parent=1 // pred_check
      _
    $region11: #{head_forward.1} parent=1 // pred_check_branch
      %482 = sbr.rel (0) target = $region13
    $region12: #{head_forward.1} parent=1 // pred_region
      %s484 = ssub.s32 256, 256
      %485 = vsyncadd [#allocation3], %s484
      %s486 = sshll.u32 [#allocation2], 4
      %s487 = int_to_ptr.vmem [resolvable:$true] %s486
      %492 = dma.vmem_to_hbm [thread:$0]  %s487, 256, %s2, [#allocation3], 128, 128, 8
    $region13: #{head_forward.1} parent=1 // pred_fallthru
      _
    // Predicated region
    $region14: #{head_forward.1} parent=1 // pred_check
      _
    $region15: #{head_forward.1} parent=1 // pred_check_branch
      %494 = sbr.rel (0) target = $region17
    $region16: #{head_forward.1} parent=1 // pred_region
      %495 = dma.done [#allocation3], 256
    $region17: #{head_forward.1} parent=1 // pred_fallthru
      _
    %496 = vsyncpa [#allocation3], 1

</llo_original>
